<compile_context>
chip_gen: v6e
topology: v6e:2x2x1
jax: 0.10.0
libtpu: 0.0.40
codegen_flags: <defaults>
</compile_context>

<pallas_src>
import functools

import jax
import jax.numpy as jnp
from jax.experimental import pallas as pl
from jax.experimental.pallas import tpu as pltpu

_SUBLANE = 8                       # batch tile must be a multiple of the sublane width
_TARGET_BLOCK_BYTES = 4 << 20      # ~4 MiB output blocks: near HBM roofline, fits v5e scoped VMEM
_MAX_TH = 2048                     # H tile cap (multiple of 128) used only when n_hid is huge
_LARGE_B = 8192                    # above this, keep >= 2 batch blocks (v7x has 2 TensorCores)
_TINY_ELEMS = 1 << 15              # below this many output elements, plain XLA wins


def _round_up(x, m):
    return (x + m - 1) // m * m


def _affine_kernel(x_ref, w_ref, b_ref, o_ref):
    # x_ref: (tb, 1), w_ref: (1, th), b_ref: (1, th), o_ref: (tb, th)
    # K=1 contraction == broadcast multiply-add; pure VPU, no MXU push/pop.
    o_ref[...] = (x_ref[...] * w_ref[...] + b_ref[...]).astype(o_ref.dtype)


def prepare_params(weight, bias):
    """One-time conversion of PyTorch-layout params (hoisted out of forward).

    weight: (n_hid, 1) (nn.Linear.weight); bias: (n_hid,).
    Returns row vectors w_row, b_row of shape (1, n_hid), float32.
    """
    n_hid = weight.shape[0]
    w_row = weight.reshape(1, n_hid).astype(jnp.float32)
    b_row = bias.reshape(1, n_hid).astype(jnp.float32)
    return w_row, b_row


@functools.partial(jax.jit, static_argnames=("use_pallas",))
def opt_network_forward(state, w_row, b_row, use_pallas=None):
    """state: (B, 1) f32 -> (B, n_hid) f32, matching nn.Linear(1, n_hid)."""
    B = state.shape[0]
    n_hid = w_row.shape[1]
    state = state.astype(jnp.float32)

    if use_pallas is None:
        use_pallas = B * n_hid >= _TINY_ELEMS
    if not use_pallas:
        # Tiny shapes: a single fused XLA broadcast affine beats any kernel launch.
        return state * w_row + b_row

    # H tiling: whole row normally; tile only if n_hid is very large.
    th = n_hid if n_hid <= _MAX_TH else _MAX_TH  # _MAX_TH is a multiple of 128

    # Batch tiling: aim for ~4 MiB output blocks (amortizes ~0.35us/step overhead),
    # but keep >= 2 batch blocks for large B so v7x shards across both TCs.
    bytes_per_row = 4 * th
    tb = min(B, max(1, _TARGET_BLOCK_BYTES // bytes_per_row))
    if B > _LARGE_B:
        tb = min(tb, pl.cdiv(B, 2))
    tb = max(_SUBLANE, _round_up(tb, _SUBLANE))

    grid = (pl.cdiv(B, tb), pl.cdiv(n_hid, th))

    return pl.pallas_call(
        _affine_kernel,
        out_shape=jax.ShapeDtypeStruct((B, n_hid), jnp.float32),
        grid_spec=pltpu.PrefetchScalarGridSpec(
            num_scalar_prefetch=0,
            grid=grid,
            in_specs=[
                pl.BlockSpec((tb, 1), lambda i, j: (i, 0)),
                pl.BlockSpec((1, th), lambda i, j: (0, j)),
                pl.BlockSpec((1, th), lambda i, j: (0, j)),
            ],
            out_specs=pl.BlockSpec((tb, th), lambda i, j: (i, j)),
        ),
        compiler_params=pltpu.CompilerParams(
            dimension_semantics=("parallel", "parallel"),
        ),
    )(state, w_row, b_row)


def _reference(state, weight, bias):
    # Same math as PyTorch nn.Linear(1, n_hid).forward
    return state.astype(jnp.float32) @ weight.reshape(-1, 1).T + bias.reshape(-1)


def _check(state, weight, bias, use_pallas):
    w_row, b_row = prepare_params(weight, bias)
    out = jax.block_until_ready(
        opt_network_forward(state, w_row, b_row, use_pallas=use_pallas))
    ref = _reference(state, weight, bias)
    assert out.shape == ref.shape, (out.shape, ref.shape)
    assert jnp.allclose(out, ref, atol=1e-5, rtol=1e-5), "mismatch vs reference"
    return out


if __name__ == "__main__":
    key = jax.random.PRNGKey(0)
    k1, k2, k3, k4, k5 = jax.random.split(key, 5)

    # NOTE: opt_network.init_weights() zero-inits weight & bias, but zeros would
    # hide bugs in the multiply/bias path, so random params are used to validate
    # the affine computation; the zero-init path is checked separately below.

    # 1) Primary small-shape test, forced through the Pallas kernel.
    n_hid, batch = 32, 8
    weight = jax.random.normal(k1, (n_hid, 1), dtype=jnp.float32)
    bias = jax.random.normal(k2, (n_hid,), dtype=jnp.float32)
    state = jax.random.normal(k3, (batch, 1), dtype=jnp.float32)
    _check(state, weight, bias, use_pallas=True)

    # 2) Batch not a multiple of 8 and n_hid not a multiple of 128
    #    (partial-block masking on both output axes), forced Pallas.
    n_hid2, batch2 = 100, 13
    weight2 = jax.random.normal(k1, (n_hid2, 1), dtype=jnp.float32)
    bias2 = jax.random.normal(k2, (n_hid2,), dtype=jnp.float32)
    state2 = jax.random.normal(k4, (batch2, 1), dtype=jnp.float32)
    _check(state2, weight2, bias2, use_pallas=True)

    # 3) Larger batch through the auto-dispatch (takes the Pallas path).
    batch3 = 3000
    state3 = jax.random.normal(k5, (batch3, 1), dtype=jnp.float32)
    _check(state3, weight, bias, use_pallas=None)

    # 4) Zero-init path used by the original module's init_weights().
    wz = jnp.zeros((n_hid, 1), jnp.float32)
    bz = jnp.zeros((n_hid,), jnp.float32)
    out_zero = _check(state, wz, bz, use_pallas=True)
    assert jnp.allclose(out_zero, jnp.zeros((batch, n_hid)), atol=1e-6)

    # 5) Tiny-shape XLA fallback path (auto-dispatch) also matches.
    _check(state, weight, bias, use_pallas=None)

    print("KERNEL_OK")
</pallas_src>

<mosaic_0001>
module attributes {stable_mosaic.version = 11 : i64} {
  func.func @_affine_kernel(%arg0: i32, %arg1: i32, %arg2: memref<8x1xf32, #tpu.memory_space<vmem>>, %arg3: memref<1x32xf32, #tpu.memory_space<vmem>>, %arg4: memref<1x32xf32, #tpu.memory_space<vmem>>, %arg5: memref<8x32xf32, #tpu.memory_space<vmem>>) attributes {dimension_semantics = [#tpu.dimension_semantics<parallel>, #tpu.dimension_semantics<parallel>], iteration_bounds = array<i64: 1, 1>, scalar_prefetch = 0 : i64, scratch_operands = 0 : i64, tpu.core_type = #tpu.core_type<tc>, window_params = [{transform_indices = @transform_0, window_bounds = array<i64: 8, 1>}, {transform_indices = @transform_1, window_bounds = array<i64: 1, 32>}, {transform_indices = @transform_2, window_bounds = array<i64: 1, 32>}, {transform_indices = @transform_3, window_bounds = array<i64: 8, 32>}]} {
    %c0 = arith.constant 0 : index
    %c0_0 = arith.constant 0 : index
    %0 = vector.load %arg2[%c0, %c0_0] : memref<8x1xf32, #tpu.memory_space<vmem>>, vector<8x1xf32>
    %c0_1 = arith.constant 0 : index
    %c0_2 = arith.constant 0 : index
    %1 = vector.load %arg3[%c0_1, %c0_2] : memref<1x32xf32, #tpu.memory_space<vmem>>, vector<1x32xf32>
    %2 = vector.broadcast %0 : vector<8x1xf32> to vector<8x32xf32>
    %3 = vector.broadcast %1 : vector<1x32xf32> to vector<8x32xf32>
    %4 = arith.mulf %2, %3 : vector<8x32xf32>
    %c0_3 = arith.constant 0 : index
    %c0_4 = arith.constant 0 : index
    %5 = vector.load %arg4[%c0_3, %c0_4] : memref<1x32xf32, #tpu.memory_space<vmem>>, vector<1x32xf32>
    %6 = vector.broadcast %5 : vector<1x32xf32> to vector<8x32xf32>
    %7 = arith.addf %4, %6 : vector<8x32xf32>
    %c0_5 = arith.constant 0 : index
    %c0_6 = arith.constant 0 : index
    %8 = vector.load %arg5[%c0_5, %c0_6] : memref<8x32xf32, #tpu.memory_space<vmem>>, vector<8x32xf32>
    tpu.vector_store %arg5[%c0_5, %c0_6], %7 {strides = array<i32>} : memref<8x32xf32, #tpu.memory_space<vmem>>, vector<8x32xf32>,
    return
  }
  func.func @transform_0(%arg0: i32, %arg1: i32) -> (i32, i32) {
    %c0_i32 = arith.constant 0 : i32
    %c0_i32_0 = arith.constant 0 : i32
    return %arg0, %c0_i32 : i32, i32
  }
  func.func @transform_1(%arg0: i32, %arg1: i32) -> (i32, i32) {
    %c0_i32 = arith.constant 0 : i32
    %c0_i32_0 = arith.constant 0 : i32
    return %c0_i32, %arg1 : i32, i32
  }
  func.func @transform_2(%arg0: i32, %arg1: i32) -> (i32, i32) {
    %c0_i32 = arith.constant 0 : i32
    %c0_i32_0 = arith.constant 0 : i32
    return %c0_i32, %arg1 : i32, i32
  }
  func.func @transform_3(%arg0: i32, %arg1: i32) -> (i32, i32) {
    %c0_i32 = arith.constant 0 : i32
    return %arg0, %arg1 : i32, i32
  }
}

</mosaic_0001>

<llo_original>
// kernel: opt_network_forward.1
$region0: #{opt_network_forward.1}
  #allocation0 [shape = 'u32[]', space=smem, size = 0x4, offset = 0x4, fixed_abs, tag = 'smem constant byte address 0x4 - core index']
  #allocation1 [shape = 'u32[144,128]{1,0:T(1,128)}', space=vmem, size = 0x12000, scoped, tag = 'internal scratch']
  %s0 = inlined_call_operand.vmem [shape: f32[8,1], index: 0, kind: input, shape index: {}]
  %s1 = inlined_call_operand.vmem [shape: f32[1,32], index: 1, kind: input, shape index: {}]
  %s2 = inlined_call_operand.vmem [shape: f32[1,32], index: 2, kind: input, shape index: {}]
  %s3 = inlined_call_operand.hbm [shape: f32[8,32], index: 3, kind: output, shape index: {}]
  %s4 = sld [smem:[#allocation0]]
  $region22: #{opt_network_forward.1} parent=0
    _
  %s6 = ssub.s32 1, %s4
  %s7 = scalar_select 0, %s6, %s4
  $region1: #{opt_network_forward.1} parent=0
    #allocation2 [shape = 'u8[4096]{0}', space=vmem, size = 0x1000, scoped, tag = 'output window, operand 0, single buffered']
    #allocation3 [shape = 's32[1]{0}', space=sflag, size = 0x4, scoped, tag = 'scoped memory for opt_network_forward.1']
    %8 = vsyncpa [#allocation3], 0
    // Predicated region
    $region2: #{opt_network_forward.1} parent=1 // pred_check
      _
    $region3: #{opt_network_forward.1} parent=1 // pred_check_branch
      %10 = sbr.rel (0) target = $region5
    $region4: #{opt_network_forward.1} parent=1 // pred_region
      _
    $region5: #{opt_network_forward.1} parent=1 // pred_fallthru
      _
    // Predicated region
    $region6: #{opt_network_forward.1} parent=1 // pred_check
      _
    $region7: #{opt_network_forward.1} parent=1 // pred_check_branch
      %12 = sbr.rel (0) target = $region9
    $region8: #{opt_network_forward.1} parent=1 // pred_region
      _
    $region9: #{opt_network_forward.1} parent=1 // pred_fallthru
      _
    // Predicated region
    $region10: #{opt_network_forward.1} parent=1 // pred_check
      _
    $region11: #{opt_network_forward.1} parent=1 // pred_check_branch
      %14 = sbr.rel (0) target = $region13
    $region12: #{opt_network_forward.1} parent=1 // pred_region
      _
    $region13: #{opt_network_forward.1} parent=1 // pred_fallthru
      _
    %v15 = vld [vmem:[%s0] sm:$0xff]
    %v16 = vld [vmem:[%s1] sm:$0x1]
    %18 = vset.pattern.permute.xlu0 0
    %19 = vperm.xlu0 %18, %v15
    %v20 = vpop.permute.xlu0 %19
    %v23 = vlaneseq
    %v24 = vshrl.u32 %v23, 7
    %v25 = vsub.s32 0, %v24
    %v26 = vrot.slane %v16, %v25
    %v28 = vmul.f32 %v20, %v26
    %v29 = vld [vmem:[%s2] sm:$0x1]
    %v31 = vlaneseq
    %v32 = vshrl.u32 %v31, 7
    %v33 = vsub.s32 0, %v32
    %v34 = vrot.slane %v29, %v33
    %v36 = vadd.f32 %v28, %v34
    %vm37 = vcmask 261120
    %38 = vst.msk [vmem:[#allocation2] sm:$0xff] %vm37, %v36
    // Predicated region
    $region14: #{opt_network_forward.1} parent=1 // pred_check
      _
    $region15: #{opt_network_forward.1} parent=1 // pred_check_branch
      %40 = sbr.rel (0) target = $region17
    $region16: #{opt_network_forward.1} parent=1 // pred_region
      %s42 = ssub.s32 128, 128
      %43 = vsyncadd [#allocation3], %s42
      %s45 = sshll.u32 [#allocation2], 4
      %s46 = int_to_ptr.vmem [resolvable:$true] %s45
      %48 = dma.vmem_to_hbm [thread:$0]  %s46, 128, %s3, [#allocation3]
    $region17: #{opt_network_forward.1} parent=1 // pred_fallthru
      _
    // Predicated region
    $region18: #{opt_network_forward.1} parent=1 // pred_check
      _
    $region19: #{opt_network_forward.1} parent=1 // pred_check_branch
      %50 = sbr.rel (0) target = $region21
    $region20: #{opt_network_forward.1} parent=1 // pred_region
      %51 = dma.done [#allocation3], 128
    $region21: #{opt_network_forward.1} parent=1 // pred_fallthru
      _
    %52 = vsyncpa [#allocation3], 1

</llo_original>
